<compile_context>
chip_gen: v6e
topology: v6e:2x2x1
jax: 0.10.0
libtpu: 0.0.40
codegen_flags: <defaults>
</compile_context>

<pallas_src>
import numpy as np

import jax
import jax.numpy as jnp
from jax.experimental import pallas as pl
from jax.experimental.pallas import tpu as pltpu


def _ffn_expert_kernel(x_ref, w1_ref, w2_ref, o_ref):
    # x_ref : (1, tm, D)   w1_ref: (1, D, tf)   w2_ref: (1, tf, D)
    # o_ref : (1, tm, D) f32 -- resident across the F (dff) reduction axis.
    f = pl.program_id(2)

    @pl.when(f == 0)
    def _init():
        o_ref[...] = jnp.zeros_like(o_ref)

    # First matmul + ReLU; MXU with f32 accumulation.
    h = jnp.dot(x_ref[0], w1_ref[0], preferred_element_type=jnp.float32)
    h = jnp.maximum(h, 0.0)
    # TODO(synk): expert_dropout > 0 not implemented (module default is 0.0).

    # Second matmul: partial contribution of this dff tile, accumulated
    # directly into the resident f32 output block.
    o_ref[0] += jnp.dot(h.astype(w2_ref.dtype), w2_ref[0],
                        preferred_element_type=jnp.float32)


def _tpu_generation():
    try:
        kind = jax.devices()[0].device_kind.lower()
    except Exception:
        return None
    for gen in ("v7", "v6", "v5"):
        if gen in kind:
            return gen
    return None


def _chip_defaults():
    """Returns (tm_max, tf_max, vmem_capacity_bytes) per TPU generation."""
    try:
        vmem_cap = int(pltpu.get_tpu_info().vmem_capacity_bytes)
    except Exception:
        vmem_cap = 128 * 2**20
    gen = _tpu_generation()
    if gen == "v5":
        # v5e is already MXU-bound at tm=256 (balance ~240 flops/byte).
        return 256, 1024, vmem_cap
    if gen == "v7" or vmem_cap <= 64 * 2**20:
        # 64 MiB/TC: tf=512 halves double-buffered weight tiles; tm=512 keeps
        # the f-loop MXU-bound (balance ~311 flops/byte).
        return 512, 512, vmem_cap
    # v6e (and other 128-MiB-class chips): large tm to beat the ~700
    # flops/byte balance point; tf=512 keeps the working set well under VMEM.
    return 1024, 512, vmem_cap


def _largest_aligned_divisor(dim, max_tile, align):
    """Largest multiple of `align` dividing `dim`, <= max_tile (or dim)."""
    if dim <= max_tile:
        return dim
    t = (max_tile // align) * align
    while t >= align:
        if dim % t == 0:
            return t
        t -= align
    return dim  # no aligned divisor; fall back to the whole dim


def _choose_token_tile(tokens, tm_max):
    """Pick (tm, padded_tokens): 128-aligned tm, zero-pad tokens if needed."""
    if tokens <= tm_max:
        tm = max(8, ((tokens + 7) // 8) * 8)   # single tile, sublane-aligned
        return tm, tm
    t = (tm_max // 128) * 128
    while t >= 128:
        if tokens % t == 0:
            return t, tokens                   # exact 128-aligned divisor
        t -= 128
    tm = max(128, (tm_max // 128) * 128)       # pad to a multiple of tm
    padded = ((tokens + tm - 1) // tm) * tm
    return tm, padded


def merged_ffn_expert(x, weight1, weight2, *, compute_dtype=jnp.bfloat16,
                      tm_max=None, tf_max=None):
    """x: (tokens, E, d_model); weight1: (E, d_model, dff); weight2: (E, dff, d_model).

    Returns (tokens, E, d_model) float32, matching MergedFFNExpert.forward
    with expert_dropout == 0.0.  compute_dtype=jnp.float32 reproduces the
    PyTorch `.float()` math exactly; the default bf16 operands (with f32 MXU
    accumulation) are a documented fast path.
    """
    tokens, num_experts, d_model = x.shape
    assert weight1.shape[0] == num_experts and weight1.shape[1] == d_model
    dff = weight1.shape[-1]
    assert weight2.shape == (num_experts, dff, d_model)

    auto_tm, auto_tf, vmem_cap = _chip_defaults()
    tm_max = auto_tm if tm_max is None else tm_max
    tf_max = auto_tf if tf_max is None else tf_max

    tm, padded_tokens = _choose_token_tile(tokens, tm_max)
    tf = _largest_aligned_divisor(dff, tf_max, 128)
    grid = (num_experts, padded_tokens // tm, dff // tf)

    # Glue matching the PyTorch transpose(0,1).  allow_input_fusion below
    # lets XLA fuse this pad/transpose/cast into the pallas_call input reads
    # instead of materializing x_e in HBM.  Weights are materialized once in
    # compute_dtype (they are re-streamed per token tile, so halving their
    # HBM footprint matters most).
    x_e = jnp.transpose(x, (1, 0, 2)).astype(compute_dtype)      # (E, T, D)
    if padded_tokens != tokens:
        x_e = jnp.pad(x_e, ((0, 0), (0, padded_tokens - tokens), (0, 0)))
    w1 = weight1.astype(compute_dtype)
    w2 = weight2.astype(compute_dtype)

    # VMEM budget (already counts double-buffering; no extra fudge factor):
    # 2x (x tile + w1 tile + w2 tile + f32 output tile) + the (tm, tf) h tile.
    cb = np.dtype(compute_dtype).itemsize
    vmem_est = (2 * (tm * d_model * cb + d_model * tf * cb + tf * d_model * cb
                     + tm * d_model * 4)
                + tm * tf * 4)
    headroom = 8 * 2**20          # Mosaic internal scratch / spill slack
    vmem_limit = int(min(vmem_cap - headroom,
                         max(vmem_est + 4 * 2**20, 32 * 2**20)))

    # Weights are re-streamed once per token tile (grid is (E, T, F)).
    t_tiles = padded_tokens // tm
    flops = 4 * num_experts * padded_tokens * d_model * dff
    bytes_accessed = int(num_experts * padded_tokens * d_model * (cb + 4)
                         + (weight1.size + weight2.size) * cb * t_tiles)

    out_e = pl.pallas_call(
        _ffn_expert_kernel,
        out_shape=jax.ShapeDtypeStruct((num_experts, padded_tokens, d_model),
                                       jnp.float32),
        grid_spec=pltpu.PrefetchScalarGridSpec(
            num_scalar_prefetch=0,
            grid=grid,
            in_specs=[
                pl.BlockSpec((1, tm, d_model), lambda e, t, f: (e, t, 0)),
                pl.BlockSpec((1, d_model, tf), lambda e, t, f: (e, 0, f)),
                pl.BlockSpec((1, tf, d_model), lambda e, t, f: (e, f, 0)),
            ],
            out_specs=pl.BlockSpec((1, tm, d_model), lambda e, t, f: (e, t, 0)),
        ),
        compiler_params=pltpu.CompilerParams(
            # Leading parallel axis is E so megacore sharding splits experts
            # (disjoint weight streams), not token tiles of the same expert.
            dimension_semantics=("parallel", "parallel", "arbitrary"),
            vmem_limit_bytes=vmem_limit,
            allow_input_fusion=[True, False, False],
        ),
        cost_estimate=pl.CostEstimate(flops=flops, transcendentals=0,
                                      bytes_accessed=bytes_accessed),
    )(x_e, w1, w2)

    out_e = out_e[:, :tokens, :]                  # drop any token padding
    return jnp.transpose(out_e, (1, 0, 2))        # (tokens, E, D), float32


def _init_params(key, local_num_experts, d_model, dim_feedforward, mp_size=1):
    """Deterministic kaiming-uniform-style init (matches parameter shapes)."""
    dff = dim_feedforward // mp_size
    k1, k2 = jax.random.split(key)
    bound1 = 1.0 / (d_model ** 0.5)
    bound2 = 1.0 / (dff ** 0.5)
    weight1 = jax.random.uniform(
        k1, (local_num_experts, d_model, dff), jnp.float32, -bound1, bound1)
    weight2 = jax.random.uniform(
        k2, (local_num_experts, dff, d_model), jnp.float32, -bound2, bound2)
    return weight1, weight2


if __name__ == "__main__":
    # Small shapes: tokens=8, local_num_experts=2, d_model=32, dim_feedforward=64
    tokens, num_experts, d_model, dim_feedforward = 8, 2, 32, 64

    key = jax.random.PRNGKey(0)
    kx, kw = jax.random.split(key)
    x = jax.random.normal(kx, (tokens, num_experts, d_model), jnp.float32)
    weight1, weight2 = _init_params(kw, num_experts, d_model, dim_feedforward)

    # Plain-JAX reference (same math as the PyTorch forward, f32 throughout).
    x_ref = jnp.transpose(x, (1, 0, 2))
    ref = jnp.einsum("etf,efd->etd",
                     jnp.maximum(jnp.einsum("etd,edf->etf", x_ref, weight1), 0.0),
                     weight2)
    ref = jnp.transpose(ref, (1, 0, 2))

    # f32-operand path: matches the PyTorch .float() math closely.
    out_f32 = jax.block_until_ready(
        merged_ffn_expert(x, weight1, weight2, compute_dtype=jnp.float32))
    assert out_f32.shape == x.shape and out_f32.dtype == jnp.float32
    assert jnp.allclose(out_f32, ref, atol=1e-5, rtol=1e-5)

    # Default bf16-operand / f32-accumulation fast path (wider tolerance).
    out_bf16 = jax.block_until_ready(merged_ffn_expert(x, weight1, weight2))
    assert out_bf16.shape == x.shape and out_bf16.dtype == jnp.float32
    assert jnp.allclose(out_bf16, ref, atol=5e-2, rtol=5e-2)

    print("KERNEL_OK")
</pallas_src>

<mosaic_0001>
module attributes {stable_mosaic.version = 11 : i64} {
  func.func @_ffn_expert_kernel(%arg0: i32, %arg1: i32, %arg2: i32, %arg3: memref<1x8x32xf32, #tpu.memory_space<vmem>>, %arg4: memref<1x32x64xf32, #tpu.memory_space<vmem>>, %arg5: memref<1x64x32xf32, #tpu.memory_space<vmem>>, %arg6: memref<1x8x32xf32, #tpu.memory_space<vmem>>) attributes {dimension_semantics = [#tpu.dimension_semantics<parallel>, #tpu.dimension_semantics<parallel>, #tpu.dimension_semantics<arbitrary>], iteration_bounds = array<i64: 2, 1, 1>, scalar_prefetch = 0 : i64, scratch_operands = 0 : i64, tpu.core_type = #tpu.core_type<tc>, window_params = [{transform_indices = @transform_0, window_bounds = array<i64: 1, 8, 32>}, {transform_indices = @transform_1, window_bounds = array<i64: 1, 32, 64>}, {transform_indices = @transform_2, window_bounds = array<i64: 1, 64, 32>}, {transform_indices = @transform_3, window_bounds = array<i64: 1, 8, 32>}]} {
    %c0_i32 = arith.constant 0 : i32
    %0 = arith.cmpi eq, %arg2, %c0_i32 : i32
    %1 = arith.extui %0 : i1 to i32
    %c0_i32_0 = arith.constant 0 : i32
    %2 = arith.cmpi ne, %1, %c0_i32_0 : i32
    scf.if %2 {
      %cst_17 = arith.constant 0.000000e+00 : f32
      %19 = vector.broadcast %cst_17 : f32 to vector<1x8x32xf32>
      %c0_18 = arith.constant 0 : index
      %c0_19 = arith.constant 0 : index
      %c0_20 = arith.constant 0 : index
      %20 = vector.load %arg6[%c0_18, %c0_19, %c0_20] : memref<1x8x32xf32, #tpu.memory_space<vmem>>, vector<1x8x32xf32>
      tpu.vector_store %arg6[%c0_18, %c0_19, %c0_20], %19 {strides = array<i32>} : memref<1x8x32xf32, #tpu.memory_space<vmem>>, vector<1x8x32xf32>,
    } else {
    }
    %c0 = arith.constant 0 : index
    %c0_1 = arith.constant 0 : index
    %c0_2 = arith.constant 0 : index
    %3 = vector.load %arg3[%c0, %c0_1, %c0_2] : memref<1x8x32xf32, #tpu.memory_space<vmem>>, vector<1x8x32xf32>
    %4 = vector.shape_cast %3 : vector<1x8x32xf32> to vector<8x32xf32>
    %c0_3 = arith.constant 0 : index
    %c0_4 = arith.constant 0 : index
    %c0_5 = arith.constant 0 : index
    %5 = vector.load %arg4[%c0_3, %c0_4, %c0_5] : memref<1x32x64xf32, #tpu.memory_space<vmem>>, vector<1x32x64xf32>
    %6 = vector.shape_cast %5 : vector<1x32x64xf32> to vector<32x64xf32>
    %cst = arith.constant dense<0.000000e+00> : vector<8x64xf32>
    %7 = tpu.matmul %4, %6, %cst {dimension_numbers = #tpu.dot_dimension_numbers<[1], [0], [0], [1], [0, 0, 1, 1], [], []>} : vector<8x32xf32>, vector<32x64xf32>, vector<8x64xf32> -> vector<8x64xf32>
    %cst_6 = arith.constant 0.000000e+00 : f32
    %8 = vector.broadcast %cst_6 : f32 to vector<8x64xf32>
    %9 = arith.maximumf %7, %8 : vector<8x64xf32>
    %c0_7 = arith.constant 0 : index
    %c0_8 = arith.constant 0 : index
    %c0_9 = arith.constant 0 : index
    %10 = vector.load %arg6[%c0_7, %c0_8, %c0_9] : memref<1x8x32xf32, #tpu.memory_space<vmem>>, vector<1x8x32xf32>
    %11 = vector.shape_cast %10 : vector<1x8x32xf32> to vector<8x32xf32>
    %c0_10 = arith.constant 0 : index
    %c0_11 = arith.constant 0 : index
    %c0_12 = arith.constant 0 : index
    %12 = vector.load %arg5[%c0_10, %c0_11, %c0_12] : memref<1x64x32xf32, #tpu.memory_space<vmem>>, vector<1x64x32xf32>
    %13 = vector.shape_cast %12 : vector<1x64x32xf32> to vector<64x32xf32>
    %cst_13 = arith.constant dense<0.000000e+00> : vector<8x32xf32>
    %14 = tpu.matmul %9, %13, %cst_13 {dimension_numbers = #tpu.dot_dimension_numbers<[1], [0], [0], [1], [0, 0, 1, 1], [], []>} : vector<8x64xf32>, vector<64x32xf32>, vector<8x32xf32> -> vector<8x32xf32>
    %15 = arith.addf %11, %14 : vector<8x32xf32>
    %c0_14 = arith.constant 0 : index
    %c0_15 = arith.constant 0 : index
    %c0_16 = arith.constant 0 : index
    %16 = vector.load %arg6[%c0_14, %c0_15, %c0_16] : memref<1x8x32xf32, #tpu.memory_space<vmem>>, vector<1x8x32xf32>
    %17 = vector.shape_cast %16 : vector<1x8x32xf32> to vector<8x32xf32>
    %18 = vector.shape_cast %15 : vector<8x32xf32> to vector<1x8x32xf32>
    tpu.vector_store %arg6[%c0_14, %c0_15, %c0_16], %18 {strides = array<i32>} : memref<1x8x32xf32, #tpu.memory_space<vmem>>, vector<1x8x32xf32>,
    return
  }
  func.func @transform_0(%arg0: i32, %arg1: i32, %arg2: i32) -> (i32, i32, i32) {
    %c0_i32 = arith.constant 0 : i32
    %c0_i32_0 = arith.constant 0 : i32
    return %arg0, %arg1, %c0_i32 : i32, i32, i32
  }
  func.func @transform_1(%arg0: i32, %arg1: i32, %arg2: i32) -> (i32, i32, i32) {
    %c0_i32 = arith.constant 0 : i32
    %c0_i32_0 = arith.constant 0 : i32
    return %arg0, %c0_i32, %arg2 : i32, i32, i32
  }
  func.func @transform_2(%arg0: i32, %arg1: i32, %arg2: i32) -> (i32, i32, i32) {
    %c0_i32 = arith.constant 0 : i32
    %c0_i32_0 = arith.constant 0 : i32
    return %arg0, %arg2, %c0_i32 : i32, i32, i32
  }
  func.func @transform_3(%arg0: i32, %arg1: i32, %arg2: i32) -> (i32, i32, i32) {
    %c0_i32 = arith.constant 0 : i32
    %c0_i32_0 = arith.constant 0 : i32
    return %arg0, %arg1, %c0_i32 : i32, i32, i32
  }
}

</mosaic_0001>

<llo_original>
// kernel: tpu_custom_call.1
$region0: #{tpu_custom_call.1}
  #allocation0 [shape = 'u32[]', space=smem, size = 0x4, offset = 0x4, fixed_abs, tag = 'smem constant byte address 0x4 - core index']
  #allocation1 [shape = 'u32[144,128]{1,0:T(1,128)}', space=vmem, size = 0x12000, scoped, tag = 'internal scratch']
  %s0 = inlined_call_operand.vmem [shape: f32[2,8,32], index: 0, kind: input, shape index: {}]
  %s1 = inlined_call_operand.vmem [shape: f32[2,32,64], index: 1, kind: input, shape index: {}]
  %s2 = inlined_call_operand.vmem [shape: f32[2,64,32], index: 2, kind: input, shape index: {}]
  %s3 = inlined_call_operand.hbm [shape: f32[2,8,32], index: 3, kind: output, shape index: {}]
  %s4 = sld [smem:[#allocation0]]
  $region49: #{tpu_custom_call.1} parent=0
    _
  %s6 = ssub.s32 1, %s4
  %s7 = scalar_select 0, %s6, %s4
  $region1: #{tpu_custom_call.1} parent=0
    #allocation2 [shape = 'u8[8192]{0}', space=vmem, size = 0x2000, scoped, tag = 'output window, operand 0']
    #allocation3 [shape = 's32[2]{0}', space=sflag, size = 0x8, scoped, tag = 'scoped memory for tpu_custom_call.1']
    %8 = vsyncpa [#allocation3], 0
    %s9 = scalar_lea.sflag [#allocation3], 1
    %10 = vsyncpa %s9, 0
    loop: start=0, step=1, limit=4
    $region2: #{tpu_custom_call.1} parent=1 // loop_pre_header
      _
    $region3: #{tpu_custom_call.1} parent=1 // loop_header
      %s12 = sphi 0, %s16
      %p13 = scmp.ge.s32.totalorder %s12, 4
      %s19 = sphi 0, %s38
      %s20 = sphi 0, %s34
      %s21 = sphi 0, %s30
      %s22 = sphi 0, %s19
      %s23 = sphi 0, %s20
      %s24 = sphi 0, %s21
      %s25 = sphi 0, %s22
      %s26 = sphi 0, %s23
      %s27 = sphi 0, %s24
      %s43 = sphi 0, %s45
      %s46 = sphi 0, %s43
      %s47 = sphi 0, %s46
      %s63 = sphi 0, %s47
      %s71 = sphi 0, %s73
      %s74 = sphi 0, %s71
      %s75 = sphi 0, %s74
      %s91 = sphi 0, %s75
      %s99 = sphi 0, %s101
      %s102 = sphi 0, %s99
      %s103 = sphi 0, %s102
      %s119 = sphi 0, %s103
      %s127 = sphi 0, %s129
      %s130 = sphi 0, %s127
      %s131 = sphi 0, %s130
      %s147 = sphi 0, %s131
    $region4: #{tpu_custom_call.1} parent=1 // loop_header_branch
      %15 = sbr.rel (%p13) target = $region8
    $region5: #{tpu_custom_call.1} parent=1 // loop_body
      %s17 = ssub.s32 %s12, 1
      %s18 = ssub.s32 %s12, 2
      %s28 = sadd.s32 1, %s21
      %p29 = scmp.ge.s32.totalorder %s28, 1
      %s30 = scalar_select %p29, 0, %s28
      %s31 = sadd.s32 1, %s20
      %s32 = scalar_select %p29, %s31, %s20
      %p33 = scmp.ge.s32.totalorder %s32, 1
      %s34 = scalar_select %p33, 0, %s32
      %s35 = sadd.s32 1, %s19
      %s36 = scalar_select %p33, %s35, %s19
      %p37 = scmp.ge.s32.totalorder %s36, 2
      %s38 = scalar_select %p37, 0, %s36
      %s39 = ssub.s32 %s19, %s38
      %s40 = ssub.s32 %s20, %s34
      %s41 = sor.u32 %s39, %s40
      %p42 = scmp.eq.s32.totalorder %s41, 0
      %s44 = sadd.s32 %s43, 1
      %s45 = scalar_select %p42, %s43, %s44
      %p48 = pneg %p42
      %p49 = scmp.eq.s32.totalorder %s12, 1
      %p50 = por %p48, %p49
      %p51 = scmp.ne.s32.totalorder %s43, %s46
      %p52 = scmp.eq.s32.totalorder %s12, 0
      %p53 = por %p51, %p52
      %p54 = scmp.ne.s32.totalorder %s43, %s46
      %p55 = scmp.eq.s32.totalorder %s17, 1
      %p56 = por %p54, %p55
      %p57 = scmp.ne.s32.totalorder %s46, %s47
      %p58 = scmp.eq.s32.totalorder %s17, 0
      %p59 = por %p57, %p58
      %p60 = scmp.ne.s32.totalorder %s46, %s47
      %p61 = scmp.eq.s32.totalorder %s18, 1
      %p62 = por %p60, %p61
      %p64 = scmp.ne.s32.totalorder %s47, %s63
      %p65 = scmp.eq.s32.totalorder %s18, 0
      %p66 = por %p64, %p65
      %s67 = ssub.s32 %s19, %s38
      %s68 = ssub.s32 %s21, %s30
      %s69 = sor.u32 %s67, %s68
      %p70 = scmp.eq.s32.totalorder %s69, 0
      %s72 = sadd.s32 %s71, 1
      %s73 = scalar_select %p70, %s71, %s72
      %p76 = pneg %p70
      %p77 = scmp.eq.s32.totalorder %s12, 1
      %p78 = por %p76, %p77
      %p79 = scmp.ne.s32.totalorder %s71, %s74
      %p80 = scmp.eq.s32.totalorder %s12, 0
      %p81 = por %p79, %p80
      %p82 = scmp.ne.s32.totalorder %s71, %s74
      %p83 = scmp.eq.s32.totalorder %s17, 1
      %p84 = por %p82, %p83
      %p85 = scmp.ne.s32.totalorder %s74, %s75
      %p86 = scmp.eq.s32.totalorder %s17, 0
      %p87 = por %p85, %p86
      %p88 = scmp.ne.s32.totalorder %s74, %s75
      %p89 = scmp.eq.s32.totalorder %s18, 1
      %p90 = por %p88, %p89
      %p92 = scmp.ne.s32.totalorder %s75, %s91
      %p93 = scmp.eq.s32.totalorder %s18, 0
      %p94 = por %p92, %p93
      %s95 = ssub.s32 %s19, %s38
      %s96 = ssub.s32 %s21, %s30
      %s97 = sor.u32 %s95, %s96
      %p98 = scmp.eq.s32.totalorder %s97, 0
      %s100 = sadd.s32 %s99, 1
      %s101 = scalar_select %p98, %s99, %s100
      %p104 = pneg %p98
      %p105 = scmp.eq.s32.totalorder %s12, 1
      %p106 = por %p104, %p105
      %p107 = scmp.ne.s32.totalorder %s99, %s102
      %p108 = scmp.eq.s32.totalorder %s12, 0
      %p109 = por %p107, %p108
      %p110 = scmp.ne.s32.totalorder %s99, %s102
      %p111 = scmp.eq.s32.totalorder %s17, 1
      %p112 = por %p110, %p111
      %p113 = scmp.ne.s32.totalorder %s102, %s103
      %p114 = scmp.eq.s32.totalorder %s17, 0
      %p115 = por %p113, %p114
      %p116 = scmp.ne.s32.totalorder %s102, %s103
      %p117 = scmp.eq.s32.totalorder %s18, 1
      %p118 = por %p116, %p117
      %p120 = scmp.ne.s32.totalorder %s103, %s119
      %p121 = scmp.eq.s32.totalorder %s18, 0
      %p122 = por %p120, %p121
      %s123 = ssub.s32 %s19, %s38
      %s124 = ssub.s32 %s20, %s34
      %s125 = sor.u32 %s123, %s124
      %p126 = scmp.eq.s32.totalorder %s125, 0
      %s128 = sadd.s32 %s127, 1
      %s129 = scalar_select %p126, %s127, %s128
      %p132 = pneg %p126
      %p133 = scmp.eq.s32.totalorder %s12, 1
      %p134 = por %p132, %p133
      %p135 = scmp.ne.s32.totalorder %s127, %s130
      %p136 = scmp.eq.s32.totalorder %s12, 0
      %p137 = por %p135, %p136
      %p138 = scmp.ne.s32.totalorder %s127, %s130
      %p139 = scmp.eq.s32.totalorder %s17, 1
      %p140 = por %p138, %p139
      %p141 = scmp.ne.s32.totalorder %s130, %s131
      %p142 = scmp.eq.s32.totalorder %s17, 0
      %p143 = por %p141, %p142
      %p144 = scmp.ne.s32.totalorder %s130, %s131
      %p145 = scmp.eq.s32.totalorder %s18, 1
      %p146 = por %p144, %p145
      %p148 = scmp.ne.s32.totalorder %s131, %s147
      %p149 = scmp.eq.s32.totalorder %s18, 0
      %p150 = por %p148, %p149
      %p151 = scmp.le.s32.totalorder 1, %s12
      %p152 = scmp.lt.s32.totalorder %s12, 3
      %p153 = pnand %p151, %p152
      %p154 = pneg %p153
      // Predicated region
      $region9: #{tpu_custom_call.1} parent=5 // pred_check
        _
      $region10: #{tpu_custom_call.1} parent=5 // pred_check_branch
        %156 = sbr.rel (%p153) target = $region12
      $region11: #{tpu_custom_call.1} parent=5 // pred_region
        %s157 = ssub.s32 %s12, 1
      $region12: #{tpu_custom_call.1} parent=5 // pred_fallthru
        _
      %p158 = scmp.lt.s32.totalorder %s12, 2
      // Predicated region
      $region13: #{tpu_custom_call.1} parent=5 // pred_check
        %p159 = pneg %p158
      $region14: #{tpu_custom_call.1} parent=5 // pred_check_branch
        %161 = sbr.rel (%p159) target = $region16
      $region15: #{tpu_custom_call.1} parent=5 // pred_region
        // Predicated region
        $region17: #{tpu_custom_call.1} parent=15 // pred_check
          %p162 = pneg %p53
        $region18: #{tpu_custom_call.1} parent=15 // pred_check_branch
          %164 = sbr.rel (%p162) target = $region20
        $region19: #{tpu_custom_call.1} parent=15 // pred_region
          %p165 = scmp.lt.s32.totalorder %s19, 1
          %s166 = scalar_select %p165, %s19, 1
          %p167 = scmp.lt.s32.totalorder %s20, 0
          %s168 = scalar_select %p167, %s20, 0
          %s169 = sadd.s32 %s168, %s166
          %s170 = smul.addr %s169, 8
          %s171 = scalar_lea.vmem %s0, %s170
        $region20: #{tpu_custom_call.1} parent=15 // pred_fallthru
          _
        // Predicated region
        $region21: #{tpu_custom_call.1} parent=15 // pred_check
          %p172 = pneg %p81
        $region22: #{tpu_custom_call.1} parent=15 // pred_check_branch
          %174 = sbr.rel (%p172) target = $region24
        $region23: #{tpu_custom_call.1} parent=15 // pred_region
          %p175 = scmp.lt.s32.totalorder %s19, 1
          %s176 = scalar_select %p175, %s19, 1
          %p177 = scmp.lt.s32.totalorder %s21, 0
          %s178 = scalar_select %p177, %s21, 0
          %s179 = smul.addr %s176, 4
          %s180 = sadd.s32 %s178, %s179
          %s181 = smul.addr %s180, 8
          %s182 = scalar_lea.vmem %s1, %s181
        $region24: #{tpu_custom_call.1} parent=15 // pred_fallthru
          _
        // Predicated region
        $region25: #{tpu_custom_call.1} parent=15 // pred_check
          %p183 = pneg %p109
        $region26: #{tpu_custom_call.1} parent=15 // pred_check_branch
          %185 = sbr.rel (%p183) target = $region28
        $region27: #{tpu_custom_call.1} parent=15 // pred_region
          %s186 = smul.u32 8, %s21
          %p187 = scmp.lt.s32.totalorder %s19, 1
          %s188 = scalar_select %p187, %s19, 1
          %p189 = scmp.lt.s32.totalorder %s186, 7
          %s190 = scalar_select %p189, %s186, 7
          %s191 = smul.addr %s188, 8
          %s192 = sadd.s32 %s190, %s191
          %s193 = smul.addr %s192, 8
          %s194 = scalar_lea.vmem %s2, %s193
          %s195 = smul.u32 8, %s21
        $region28: #{tpu_custom_call.1} parent=15 // pred_fallthru
          _
      $region16: #{tpu_custom_call.1} parent=5 // pred_fallthru
        _
      %p196 = scmp.le.s32.totalorder 1, %s12
      %p197 = scmp.lt.s32.totalorder %s12, 3
      %p198 = pnand %p196, %p197
      %p199 = pneg %p198
      // Predicated region
      $region29: #{tpu_custom_call.1} parent=5 // pred_check
        _
      $region30: #{tpu_custom_call.1} parent=5 // pred_check_branch
        %201 = sbr.rel (%p198) target = $region32
      $region31: #{tpu_custom_call.1} parent=5 // pred_region
        %s202 = ssub.s32 %s12, 1
        %p203 = scmp.lt.s32.totalorder %s22, 1
        %s204 = scalar_select %p203, %s22, 1
        %p205 = scmp.lt.s32.totalorder %s23, 0
        %s206 = scalar_select %p205, %s23, 0
        %s207 = sadd.s32 %s206, %s204
        %s208 = smul.addr %s207, 8
        %s209 = scalar_lea.vmem %s0, %s208
        %p210 = pneg %p59
        %p211 = pneg %p56
        %p212 = scmp.lt.s32.totalorder %s22, 1
        %s213 = scalar_select %p212, %s22, 1
        %p214 = scmp.lt.s32.totalorder %s24, 0
        %s215 = scalar_select %p214, %s24, 0
        %s216 = smul.addr %s213, 4
        %s217 = sadd.s32 %s215, %s216
        %s218 = smul.addr %s217, 8
        %s219 = scalar_lea.vmem %s1, %s218
        %p220 = pneg %p87
        %p221 = pneg %p84
        %s222 = smul.u32 8, %s24
        %p223 = scmp.lt.s32.totalorder %s22, 1
        %s224 = scalar_select %p223, %s22, 1
        %p225 = scmp.lt.s32.totalorder %s222, 7
        %s226 = scalar_select %p225, %s222, 7
        %s227 = smul.addr %s224, 8
        %s228 = sadd.s32 %s226, %s227
        %s229 = smul.addr %s228, 8
        %s230 = scalar_lea.vmem %s2, %s229
        %p231 = pneg %p115
        %p232 = pneg %p112
        %p233 = pneg %p143
        %p234 = pneg %p140
        %s235 = sand.u32 %s130, 1
        %s236 = scalar_lea.sflag [#allocation3], %s235
        %s237 = sand.u32 %s130, 1
        %s238 = smul.addr %s237, 8
        %s239 = scalar_lea.vmem [#allocation2], %s238
        %p240 = scmp.lt.s32.totalorder %s22, 1
        %s241 = scalar_select %p240, %s22, 1
        %p242 = scmp.lt.s32.totalorder %s23, 0
        %s243 = scalar_select %p242, %s23, 0
        %s244 = sadd.s32 %s243, %s241
        %s245 = smul.addr %s244, 8
        %s246 = scalar_lea.vmem %s0, %s245
        %p247 = scmp.lt.s32.totalorder %s22, 1
        %s248 = scalar_select %p247, %s22, 1
        %p249 = scmp.lt.s32.totalorder %s24, 0
        %s250 = scalar_select %p249, %s24, 0
        %s251 = smul.addr %s248, 4
        %s252 = sadd.s32 %s250, %s251
        %s253 = smul.addr %s252, 8
        %s254 = scalar_lea.vmem %s1, %s253
        %s255 = smul.u32 8, %s24
        %p256 = scmp.lt.s32.totalorder %s22, 1
        %s257 = scalar_select %p256, %s22, 1
        %p258 = scmp.lt.s32.totalorder %s255, 7
        %s259 = scalar_select %p258, %s255, 7
        %s260 = smul.addr %s257, 8
        %s261 = sadd.s32 %s259, %s260
        %s262 = smul.addr %s261, 8
        %s263 = scalar_lea.vmem %s2, %s262
        %s264 = smul.u32 8, %s24
        %p265 = scmp.eq.s32.totalorder %s24, 0
        // Predicated region
        $region33: #{tpu_custom_call.1} parent=31 // pred_check
          %p266 = pneg %p265
        $region34: #{tpu_custom_call.1} parent=31 // pred_check_branch
          %268 = sbr.rel (%p266) target = $region36
        $region35: #{tpu_custom_call.1} parent=31 // pred_region
          %vm269 = vcmask 261120
          %270 = vst.msk [vmem:[%s239] sm:$0xff] %vm269, 0.0
        $region36: #{tpu_custom_call.1} parent=31 // pred_fallthru
          _
        %v271 = vld [vmem:[%s246] sm:$0xff]
        %v272 = vld [vmem:[%s254] sm:$0xff]
        %v273 = vld [vmem:[%s254 + $0x8] sm:$0xff]
        %v274 = vld [vmem:[%s254 + $0x10] sm:$0xff]
        %v275 = vld [vmem:[%s254 + $0x18] sm:$0xff]
        %vm276 = vcmask 261120
        %v278 = vsel %vm276, %v271, 0
        %280 = vmatprep.subr.mxu0 0.0
        %281 = vmatpush1.msra.mxu0 0.0
        %282 = vmatprep.subr.mxu0 0.0
        %283 = vmatpush1.msra.mxu0 0.0
        %284 = vmatprep.subr.mxu0 0.0
        %285 = vmatpush1.msra.mxu0 0.0
        %286 = vmatprep.subr.mxu0 0.0
        %287 = vmatpush1.msra.mxu0 0.0
        %288 = vmatprep.subr.mxu0 0.0
        %289 = vmatpush1.msra.mxu0 0.0
        %290 = vmatprep.subr.mxu0 0.0
        %291 = vmatpush1.msra.mxu0 0.0
        %292 = vmatprep.subr.mxu0 0.0
        %293 = vmatpush1.msra.mxu0 0.0
        %294 = vmatprep.subr.mxu0 0.0
        %295 = vmatpush1.msra.mxu0 0.0
        %296 = vmatprep.subr.mxu0 0.0
        %297 = vmatpush1.msra.mxu0 0.0
        %298 = vmatprep.subr.mxu0 0.0
        %299 = vmatpush1.msra.mxu0 0.0
        %300 = vmatprep.subr.mxu0 0.0
        %301 = vmatpush1.msra.mxu0 0.0
        %302 = vmatprep.subr.mxu0 0.0
        %303 = vmatpush1.msra.mxu0 0.0
        %304 = vmatprep.subr.mxu0 0.0
        %305 = vmatpush1.msra.mxu0 %v275
        %306 = vmatprep.subr.mxu0 0.0
        %307 = vmatpush1.msra.mxu0 %v274
        %308 = vmatprep.subr.mxu0 0.0
        %309 = vmatpush1.msra.mxu0 %v273
        %310 = vmatprep.subr.mxu0 0.0
        %311 = vmatpush1.msra.mxu0 %v272
        %312 = vmatprep.subr.mxu0 0.0
        %313 = vmatpush2.msra.mxu0 0.0
        %314 = vmatprep.subr.mxu0 0.0
        %315 = vmatpush2.msra.mxu0 0.0
        %316 = vmatprep.subr.mxu0 0.0
        %317 = vmatpush2.msra.mxu0 0.0
        %318 = vmatprep.subr.mxu0 0.0
        %319 = vmatpush2.msra.mxu0 0.0
        %320 = vmatprep.subr.mxu0 0.0
        %321 = vmatpush2.msra.mxu0 0.0
        %322 = vmatprep.subr.mxu0 0.0
        %323 = vmatpush2.msra.mxu0 0.0
        %324 = vmatprep.subr.mxu0 0.0
        %325 = vmatpush2.msra.mxu0 0.0
        %326 = vmatprep.subr.mxu0 0.0
        %327 = vmatpush2.msra.mxu0 0.0
        %328 = vmatprep.subr.mxu0 0.0
        %329 = vmatpush2.msra.mxu0 0.0
        %330 = vmatprep.subr.mxu0 0.0
        %331 = vmatpush2.msra.mxu0 0.0
        %332 = vmatprep.subr.mxu0 0.0
        %333 = vmatpush2.msra.mxu0 0.0
        %334 = vmatprep.subr.mxu0 0.0
        %335 = vmatpush2.msra.mxu0 0.0
        %336 = vmatprep.subr.mxu0 0.0
        %337 = vmatpush2.msra.mxu0 0.0
        %338 = vmatprep.subr.mxu0 0.0
        %339 = vmatpush2.msra.mxu0 0.0
        %340 = vmatprep.subr.mxu0 0.0
        %341 = vmatpush2.msra.mxu0 0.0
        %342 = vmatprep.subr.mxu0 0.0
        %343 = vmatpush2.msra.mxu0 0.0
        %344 = vmatprep.mubr.f32.mxu0 0.0
        %345 = vmatmul.mubr.f32.gmra.mxu0 %v278
        %v346 = vpop.f32.mrf.mxu0
        %v347 = vadd.f32 0.0, %v346
        %v348 = vpop.f32.mrf.mxu0
        %349 = vdwg.mxu0
        %v350 = vmax.f32 %v347, 0.0
        %v351 = vld [vmem:[%s239] sm:$0xff]
        %v352 = vld [vmem:[%s263] sm:$0xff]
        %v353 = vld [vmem:[%s263 + $0x8] sm:$0xff]
        %v354 = vld [vmem:[%s263 + $0x10] sm:$0xff]
        %v355 = vld [vmem:[%s263 + $0x18] sm:$0xff]
        %v356 = vld [vmem:[%s263 + $0x20] sm:$0xff]
        %v357 = vld [vmem:[%s263 + $0x28] sm:$0xff]
        %v358 = vld [vmem:[%s263 + $0x30] sm:$0xff]
        %v359 = vld [vmem:[%s263 + $0x38] sm:$0xff]
        %vm360 = vcmask 523264
        %v362 = vsel %vm360, %v350, 0
        %364 = vmatprep.subr.mxu0 0.0
        %365 = vmatpush1.msra.mxu0 0.0
        %366 = vmatprep.subr.mxu0 0.0
        %367 = vmatpush1.msra.mxu0 0.0
        %368 = vmatprep.subr.mxu0 0.0
        %369 = vmatpush1.msra.mxu0 0.0
        %370 = vmatprep.subr.mxu0 0.0
        %371 = vmatpush1.msra.mxu0 0.0
        %372 = vmatprep.subr.mxu0 0.0
        %373 = vmatpush1.msra.mxu0 0.0
        %374 = vmatprep.subr.mxu0 0.0
        %375 = vmatpush1.msra.mxu0 0.0
        %376 = vmatprep.subr.mxu0 0.0
        %377 = vmatpush1.msra.mxu0 0.0
        %378 = vmatprep.subr.mxu0 0.0
        %379 = vmatpush1.msra.mxu0 0.0
        %380 = vmatprep.subr.mxu0 0.0
        %381 = vmatpush1.msra.mxu0 %v359
        %382 = vmatprep.subr.mxu0 0.0
        %383 = vmatpush1.msra.mxu0 %v358
        %384 = vmatprep.subr.mxu0 0.0
        %385 = vmatpush1.msra.mxu0 %v357
        %386 = vmatprep.subr.mxu0 0.0
        %387 = vmatpush1.msra.mxu0 %v356
        %388 = vmatprep.subr.mxu0 0.0
        %389 = vmatpush1.msra.mxu0 %v355
        %390 = vmatprep.subr.mxu0 0.0
        %391 = vmatpush1.msra.mxu0 %v354
        %392 = vmatprep.subr.mxu0 0.0
        %393 = vmatpush1.msra.mxu0 %v353
        %394 = vmatprep.subr.mxu0 0.0
        %395 = vmatpush1.msra.mxu0 %v352
        %396 = vmatprep.subr.mxu0 0.0
        %397 = vmatpush2.msra.mxu0 0.0
        %398 = vmatprep.subr.mxu0 0.0
        %399 = vmatpush2.msra.mxu0 0.0
        %400 = vmatprep.subr.mxu0 0.0
        %401 = vmatpush2.msra.mxu0 0.0
        %402 = vmatprep.subr.mxu0 0.0
        %403 = vmatpush2.msra.mxu0 0.0
        %404 = vmatprep.subr.mxu0 0.0
        %405 = vmatpush2.msra.mxu0 0.0
        %406 = vmatprep.subr.mxu0 0.0
        %407 = vmatpush2.msra.mxu0 0.0
        %408 = vmatprep.subr.mxu0 0.0
        %409 = vmatpush2.msra.mxu0 0.0
        %410 = vmatprep.subr.mxu0 0.0
        %411 = vmatpush2.msra.mxu0 0.0
        %412 = vmatprep.subr.mxu0 0.0
        %413 = vmatpush2.msra.mxu0 0.0
        %414 = vmatprep.subr.mxu0 0.0
        %415 = vmatpush2.msra.mxu0 0.0
        %416 = vmatprep.subr.mxu0 0.0
        %417 = vmatpush2.msra.mxu0 0.0
        %418 = vmatprep.subr.mxu0 0.0
        %419 = vmatpush2.msra.mxu0 0.0
        %420 = vmatprep.subr.mxu0 0.0
        %421 = vmatpush2.msra.mxu0 0.0
        %422 = vmatprep.subr.mxu0 0.0
        %423 = vmatpush2.msra.mxu0 0.0
        %424 = vmatprep.subr.mxu0 0.0
        %425 = vmatpush2.msra.mxu0 0.0
        %426 = vmatprep.subr.mxu0 0.0
        %427 = vmatpush2.msra.mxu0 0.0
        %428 = vmatprep.mubr.f32.mxu0 0.0
        %429 = vmatmul.mubr.f32.gmra.mxu0 %v362
        %v430 = vpop.f32.mrf.mxu0
        %v431 = vadd.f32 0.0, %v430
        %v432 = vpop.f32.mrf.mxu0
        %433 = vdwg.mxu0
        %v434 = vadd.f32 %v351, %v431
        %435 = vst.msk [vmem:[%s239] sm:$0xff] %vm276, %v434
        %s436 = sand.u32 %s130, 1
        %s437 = scalar_lea.sflag [#allocation3], %s436
        %s438 = sand.u32 %s130, 1
        %s439 = smul.addr %s438, 8
        %s440 = scalar_lea.vmem [#allocation2], %s439
        // Predicated region
        $region37: #{tpu_custom_call.1} parent=31 // pred_check
          %p441 = pneg %p140
        $region38: #{tpu_custom_call.1} parent=31 // pred_check_branch
          %443 = sbr.rel (%p441) target = $region40
        $region39: #{tpu_custom_call.1} parent=31 // pred_region
          %s445 = ssub.s32 128, 128
          %446 = vsyncadd %s437, %s445
          %s447 = sadd.s32 %s23, %s22
          %s448 = smul.addr %s447, 128
          %s449 = scalar_lea.hbm %s3, %s448
          %s451 = sshll.u32 %s440, 4
          %s452 = int_to_ptr.vmem [resolvable:$true] %s451
          %454 = dma.vmem_to_hbm [thread:$0]  %s452, 128, %s449, %s437
        $region40: #{tpu_custom_call.1} parent=31 // pred_fallthru
          _
      $region32: #{tpu_custom_call.1} parent=5 // pred_fallthru
        _
      %p455 = scmp.le.s32.totalorder 2, %s12
      // Predicated region
      $region41: #{tpu_custom_call.1} parent=5 // pred_check
        %p456 = pneg %p455
      $region42: #{tpu_custom_call.1} parent=5 // pred_check_branch
        %458 = sbr.rel (%p456) target = $region44
      $region43: #{tpu_custom_call.1} parent=5 // pred_region
        %s459 = ssub.s32 %s12, 2
        // Predicated region
        $region45: #{tpu_custom_call.1} parent=43 // pred_check
          %p460 = pneg %p146
        $region46: #{tpu_custom_call.1} parent=43 // pred_check_branch
          %462 = sbr.rel (%p460) target = $region48
        $region47: #{tpu_custom_call.1} parent=43 // pred_region
          %s463 = sand.u32 %s131, 1
          %s464 = scalar_lea.sflag [#allocation3], %s463
          %s465 = sand.u32 %s131, 1
          %s466 = smul.addr %s465, 8
          %s467 = scalar_lea.vmem [#allocation2], %s466
          %468 = dma.done %s464, 128
        $region48: #{tpu_custom_call.1} parent=43 // pred_fallthru
          _
      $region44: #{tpu_custom_call.1} parent=5 // pred_fallthru
        _
    $region6: #{tpu_custom_call.1} parent=1 // loop_footer
      %s16 = sadd.s32 1, %s12
    $region7: #{tpu_custom_call.1} parent=1 // loop_footer_branch
      %11 = sbr.rel target = $region3
    $region8: #{tpu_custom_call.1} parent=1 // loop_exit
      _
    %469 = vsyncpa [#allocation3], 1
    %s470 = scalar_lea.sflag [#allocation3], 1
    %471 = vsyncpa %s470, 1

</llo_original>
